<compile_context>
chip_gen: v5e
topology: v5e:2x2
jax: 0.10.0
libtpu: 0.0.40
codegen_flags: <defaults>
</compile_context>

<pallas_src>
import functools

import jax
import jax.numpy as jnp
from jax.experimental import pallas as pl
from jax.experimental.pallas import tpu as pltpu

_LANE = 128


def _negation_kernel(x_ref, o_ref, *, scale, apply_scale):
    # out = -x [* scale]; scale is a Python-float immediate (weak-typed).
    r = -x_ref[...]
    if apply_scale:
        r = r * scale
    o_ref[...] = r.astype(o_ref.dtype)


def negation_forward(x, scale=1.0, *, block_rows=1024, donate=False):
    """Pallas implementation of Negation.forward / robustness_trace.

    Args:
      x: jnp.ndarray of shape [B, T, D] (any shape works; treated elementwise).
      scale: Python scalar. If scale == 1 no multiply is applied (matches the
             PyTorch branch exactly).
      block_rows: rows of the flattened (rows, 128) slab processed per grid
             step (multiple of 8). 512-1024 hits the HBM roofline plateau.
      donate: if True, alias the input buffer to the output (in-place).
    Returns:
      jnp.ndarray with the same shape and dtype as x.
    """
    orig_shape = x.shape
    dtype = x.dtype
    n = int(x.size)
    if n == 0:
        return x

    rows = -(-n // _LANE)                       # ceil(n / 128)
    if rows <= block_rows:
        rows_padded = -(-rows // 8) * 8         # single block; 8-sublane aligned
        br = rows_padded
    else:
        br = block_rows                         # multiple of 8
        rows_padded = -(-rows // br) * br

    padded_n = rows_padded * _LANE
    flat = x.reshape(-1)
    if padded_n != n:
        flat = jnp.pad(flat, (0, padded_n - n))
    x2d = flat.reshape(rows_padded, _LANE)      # lane-dense slab

    kernel = functools.partial(
        _negation_kernel,
        scale=float(scale),
        apply_scale=(scale != 1),
    )

    out2d = pl.pallas_call(
        kernel,
        out_shape=jax.ShapeDtypeStruct((rows_padded, _LANE), dtype),
        grid=(rows_padded // br,),
        in_specs=[pl.BlockSpec((br, _LANE), lambda i: (i, 0))],
        out_specs=pl.BlockSpec((br, _LANE), lambda i: (i, 0)),
        compiler_params=pltpu.CompilerParams(
            dimension_semantics=("parallel",),
        ),
        input_output_aliases=({0: 0} if donate else {}),
    )(x2d)

    return out2d.reshape(-1)[:n].reshape(orig_shape)


if __name__ == "__main__":
    key = jax.random.PRNGKey(0)
    B, T, D = 2, 8, 32  # [batch_size, time_dim, x_dim]
    x = jax.random.normal(key, (B, T, D), dtype=jnp.float32)

    # scale == 1 path (default forward behavior): out = -x
    out1 = jax.block_until_ready(negation_forward(x, scale=1.0))
    assert out1.shape == x.shape and out1.dtype == x.dtype
    assert jnp.allclose(out1, -x, atol=1e-6), "scale==1 mismatch"

    # scale != 1 path: out = -x * scale
    out2 = jax.block_until_ready(negation_forward(x, scale=2.5))
    assert jnp.allclose(out2, -x * 2.5, atol=1e-6), "scaled mismatch"

    # Ragged total size (exercises lane/sublane padding path).
    x3 = jax.random.normal(jax.random.PRNGKey(0), (2, 7, 5), dtype=jnp.float32)
    out3 = jax.block_until_ready(negation_forward(x3, scale=1.0))
    assert jnp.allclose(out3, -x3, atol=1e-6), "padded-path mismatch"

    print("KERNEL_OK")
</pallas_src>

<mosaic_0001>
module attributes {stable_mosaic.version = 11 : i64} {
  func.func @_negation_kernel(%arg0: i32, %arg1: memref<8x128xf32, #tpu.memory_space<vmem>>, %arg2: memref<8x128xf32, #tpu.memory_space<vmem>>) attributes {dimension_semantics = [#tpu.dimension_semantics<parallel>], iteration_bounds = array<i64: 1>, scalar_prefetch = 0 : i64, scratch_operands = 0 : i64, tpu.core_type = #tpu.core_type<tc>, window_params = [{transform_indices = @transform_0, window_bounds = array<i64: 8, 128>}, {transform_indices = @transform_1, window_bounds = array<i64: 8, 128>}]} {
    %c0 = arith.constant 0 : index
    %c0_0 = arith.constant 0 : index
    %0 = vector.load %arg1[%c0, %c0_0] : memref<8x128xf32, #tpu.memory_space<vmem>>, vector<8x128xf32>
    %cst = arith.constant 0.000000e+00 : f32
    %1 = vector.broadcast %cst : f32 to vector<8x128xf32>
    %2 = arith.subf %1, %0 : vector<8x128xf32>
    %c0_1 = arith.constant 0 : index
    %c0_2 = arith.constant 0 : index
    %3 = vector.load %arg2[%c0_1, %c0_2] : memref<8x128xf32, #tpu.memory_space<vmem>>, vector<8x128xf32>
    tpu.vector_store %arg2[%c0_1, %c0_2], %2 {strides = array<i32>} : memref<8x128xf32, #tpu.memory_space<vmem>>, vector<8x128xf32>,
    return
  }
  func.func @transform_0(%arg0: i32) -> (i32, i32) {
    %c0_i32 = arith.constant 0 : i32
    %c0_i32_0 = arith.constant 0 : i32
    return %arg0, %c0_i32 : i32, i32
  }
  func.func @transform_1(%arg0: i32) -> (i32, i32) {
    %c0_i32 = arith.constant 0 : i32
    %c0_i32_0 = arith.constant 0 : i32
    return %arg0, %c0_i32 : i32, i32
  }
}

</mosaic_0001>

<llo_original>
// kernel: tpu_custom_call.1
$region0: #{tpu_custom_call.1}
  #allocation0 [shape = 'u32[]', space=smem, size = 0x4, offset = 0x4, fixed_abs, tag = 'smem constant byte address 0x4 - core index']
  #allocation1 [shape = 'u32[72,128]{1,0:T(1,128)}', space=vmem, size = 0x9000, scoped, tag = 'internal scratch']
  %s0 = inlined_call_operand.hbm [shape: f32[8,128], index: 0, kind: input, shape index: {}]
  %s1 = inlined_call_operand.hbm [shape: f32[8,128], index: 1, kind: output, shape index: {}]
  %s2 = sld [smem:[#allocation0]]
  $region18: #{tpu_custom_call.1} parent=0
    _
  %s4 = ssub.s32 1, %s2
  %s5 = scalar_select 0, %s4, %s2
  $region1: #{tpu_custom_call.1} parent=0
    #allocation2 [shape = 'u8[4096]{0}', space=vmem, size = 0x1000, scoped, tag = 'input window, operand 0, single buffered']
    #allocation3 [shape = 's32[1]{0}', space=sflag, size = 0x4, scoped, tag = 'scoped memory for tpu_custom_call.1']
    #allocation4 [shape = 's32[1]{0}', space=sflag, size = 0x4, scoped, tag = 'scoped memory for tpu_custom_call.1']
    #allocation5 [shape = 'u8[4096]{0}', space=vmem, size = 0x1000, scoped, tag = 'output window, operand 0, single buffered']
    %6 = vsyncpa [#allocation3], 0
    %7 = vsyncpa [#allocation4], 0
    // Predicated region
    $region2: #{tpu_custom_call.1} parent=1 // pred_check
      _
    $region3: #{tpu_custom_call.1} parent=1 // pred_check_branch
      %9 = sbr.rel (0) target = $region5
    $region4: #{tpu_custom_call.1} parent=1 // pred_region
      %11 = vsyncadd [#allocation3], 0
      %s13 = sshll.u32 %s0, 4
      %s14 = int_to_ptr.hbm [resolvable:$true] %s13
      %s15 = sshll.u32 [#allocation2], 4
      %s16 = int_to_ptr.vmem [resolvable:$true] %s15
      %18 = dma.hbm_to_vmem [thread:$0]  %s14, 128, %s16, [#allocation3]
    $region5: #{tpu_custom_call.1} parent=1 // pred_fallthru
      _
    // Predicated region
    $region6: #{tpu_custom_call.1} parent=1 // pred_check
      _
    $region7: #{tpu_custom_call.1} parent=1 // pred_check_branch
      %20 = sbr.rel (0) target = $region9
    $region8: #{tpu_custom_call.1} parent=1 // pred_region
      %22 = dma.done [#allocation3], 128
    $region9: #{tpu_custom_call.1} parent=1 // pred_fallthru
      _
    %v23 = vld [vmem:[#allocation2] sm:$0xff]
    %v24 = vsub.f32 0.0, %v23
    %25 = vst [vmem:[#allocation5] sm:$0xff] %v24
    // Predicated region
    $region10: #{tpu_custom_call.1} parent=1 // pred_check
      _
    $region11: #{tpu_custom_call.1} parent=1 // pred_check_branch
      %27 = sbr.rel (0) target = $region13
    $region12: #{tpu_custom_call.1} parent=1 // pred_region
      %29 = vsyncadd [#allocation4], 0
      %s31 = sshll.u32 [#allocation5], 4
      %s32 = int_to_ptr.vmem [resolvable:$true] %s31
      %s33 = sshll.u32 %s1, 4
      %s34 = int_to_ptr.hbm [resolvable:$true] %s33
      %36 = dma.vmem_to_hbm [thread:$0]  %s32, 128, %s34, [#allocation4]
    $region13: #{tpu_custom_call.1} parent=1 // pred_fallthru
      _
    // Predicated region
    $region14: #{tpu_custom_call.1} parent=1 // pred_check
      _
    $region15: #{tpu_custom_call.1} parent=1 // pred_check_branch
      %38 = sbr.rel (0) target = $region17
    $region16: #{tpu_custom_call.1} parent=1 // pred_region
      %40 = dma.done [#allocation4], 128
    $region17: #{tpu_custom_call.1} parent=1 // pred_fallthru
      _
    %41 = vsyncpa [#allocation3], 1
    %42 = vsyncpa [#allocation4], 1

</llo_original>
